<compile_context>
chip_gen: v5e
topology: v5e:2x2
jax: 0.10.0
libtpu: 0.0.40
codegen_flags: <defaults>
</compile_context>

<pallas_src>
import functools

import jax
import jax.numpy as jnp
from jax import lax
from jax.experimental import pallas as pl
from jax.experimental.pallas import tpu as pltpu

_LANES = 128


def _dice_sums_kernel(logits_ref, targets_ref, inter_ref, pred_ref, targ_ref,
                      *, hw, need_mask):
    # logits_ref / targets_ref: (1, C, r_tile, 128)
    # inter/pred/targ refs:     (1, 1, C, acc_rows, 128), resident across j.
    j = pl.program_id(2)

    @pl.when(j == 0)
    def _():
        inter_ref[...] = jnp.zeros_like(inter_ref)
        pred_ref[...] = jnp.zeros_like(pred_ref)
        targ_ref[...] = jnp.zeros_like(targ_ref)

    num_classes = logits_ref.shape[1]
    r_tile = logits_ref.shape[2]
    acc_rows = inter_ref.shape[3]
    groups = r_tile // acc_rows          # r_tile % acc_rows == 0 by construction

    # Pass 1: running max over the (small, static) class axis — pure VPU.
    mx = logits_ref[0, 0].astype(jnp.float32)
    for c in range(1, num_classes):
        mx = jnp.maximum(mx, logits_ref[0, c].astype(jnp.float32))

    # Validity mask for ragged tails / lane padding. Static Python flag, so
    # fully-divisible shapes pay nothing for it.
    if need_mask:
        p = pl.program_id(0)
        tid = p * pl.num_programs(2) + j                 # logical tile index
        row = lax.broadcasted_iota(jnp.int32, (r_tile, _LANES), 0)
        lane = lax.broadcasted_iota(jnp.int32, (r_tile, _LANES), 1)
        pix = (tid * r_tile + row) * _LANES + lane
        valid = pix < hw
    else:
        valid = None

    def _fold(a):                        # (r_tile, 128) -> (acc_rows, 128)
        if groups == 1:
            return a
        # Free regrouping of vregs + pure vreg adds.
        return a.reshape(groups, acc_rows, _LANES).sum(axis=0)

    # Pass 2: first-hit argmax scan fused with the three accumulations.
    # First class attaining the max wins -> matches torch.argmax tie rule.
    # TODO(synk): NaN logits give an all-zero one-hot here (differs from torch).
    found = None
    for c in range(num_classes):
        x_c = logits_ref[0, c].astype(jnp.float32)
        t_c = targets_ref[0, c].astype(jnp.float32)
        is_max = x_c == mx
        if found is None:
            hit = is_max
            found = is_max
        else:
            hit = jnp.logical_and(is_max, jnp.logical_not(found))
            found = jnp.logical_or(found, is_max)
        if valid is not None:
            hit = jnp.logical_and(hit, valid)
            t_c = jnp.where(valid, t_c, 0.0)
        inter_ref[0, 0, c] += _fold(jnp.where(hit, t_c, 0.0))
        pred_ref[0, 0, c] += _fold(hit.astype(jnp.float32))
        targ_ref[0, 0, c] += _fold(t_c)


def dice_coeff(logits, targets, smooth=1.0, dataset="generic", max_rows=None):
    """Pallas implementation of DiceCoeff.forward (inputs are NCHW)."""
    N, C, H, W = targets.shape
    assert logits.shape == targets.shape
    HW = H * W

    # ---- pixel axis -> (R, 128) lane-major layout (free reshape) -----------
    hw_pad = -(-HW // _LANES) * _LANES
    logits3 = logits.reshape(N, C, HW)
    targets3 = targets.reshape(N, C, HW)
    if hw_pad != HW:
        # Rare path (H*W not lane aligned); padded pixels are masked in-kernel.
        logits3 = jnp.pad(logits3, ((0, 0), (0, 0), (0, hw_pad - HW)))
        targets3 = jnp.pad(targets3, ((0, 0), (0, 0), (0, hw_pad - HW)))
    R = hw_pad // _LANES
    logits4 = logits3.reshape(N, C, R, _LANES)
    targets4 = targets3.reshape(N, C, R, _LANES)

    # ---- tile sizing: ~2 MiB per double-buffered input block ---------------
    # 2 inputs x 2 pipeline buffers x C x r_tile x 128 x itemsize stays well
    # under every generation's scoped-VMEM default (v5e's 16 MiB is the
    # tightest; v7x has only 64 MiB physical), leaving headroom for the
    # compiler temporaries (mx / found).
    it_bytes = (jnp.dtype(logits.dtype).itemsize
                + jnp.dtype(targets.dtype).itemsize)
    if max_rows is None:
        budget_bytes = 8 * 1024 * 1024
        per_row_bytes = 2 * it_bytes * C * _LANES
        max_rows = min(2048, max(8, (budget_bytes // per_row_bytes) // 8 * 8))

    if R <= max_rows:
        r_tile = R                       # single tile: any row count is legal
    else:
        r_tile = max(8, (max_rows // 8) * 8)
    num_j = -(-R // r_tile)

    # 2-way pixel-super-tile axis so both v7x TensorCores get work even when
    # the batch axis alone can't be split (no effect on v5e/v6e: 1 TC).
    P = 2 if num_j >= 2 else 1
    j_inner = -(-num_j // P)

    acc_rows = 8 if r_tile % 8 == 0 else r_tile
    covered = P * j_inner * r_tile * _LANES
    need_mask = covered != HW

    if P * j_inner != num_j:
        def in_map(p, n, j):
            # Clamp the duplicated overflow tile (its pixels are masked out).
            return (n, 0, jnp.minimum(p * j_inner + j, num_j - 1), 0)
    else:
        def in_map(p, n, j):
            return (n, 0, p * j_inner + j, 0)

    in_spec = pl.BlockSpec((1, C, r_tile, _LANES), in_map)
    out_spec = pl.BlockSpec((1, 1, C, acc_rows, _LANES),
                            lambda p, n, j: (p, n, 0, 0, 0))
    out_shape = [jax.ShapeDtypeStruct((P, N, C, acc_rows, _LANES), jnp.float32)
                 for _ in range(3)]

    kernel = functools.partial(_dice_sums_kernel, hw=HW, need_mask=need_mask)

    cost = pl.CostEstimate(
        flops=int(8 * N * C * HW),
        transcendentals=0,
        bytes_accessed=int(it_bytes * N * C * hw_pad
                           + 3 * 4 * P * N * C * acc_rows * _LANES))

    inter_p, pred_p, targ_p = pl.pallas_call(
        kernel,
        out_shape=out_shape,
        grid_spec=pltpu.PrefetchScalarGridSpec(
            num_scalar_prefetch=0,
            grid=(P, N, j_inner),
            in_specs=[in_spec, in_spec],
            out_specs=[out_spec, out_spec, out_spec],
        ),
        compiler_params=pltpu.CompilerParams(
            dimension_semantics=("parallel", "parallel", "arbitrary")),
        cost_estimate=cost,
    )(logits4, targets4)

    inter_sum = inter_p.sum(axis=(0, 1, 3, 4))   # (C,)
    pred_sum = pred_p.sum(axis=(0, 1, 3, 4))
    targ_sum = targ_p.sum(axis=(0, 1, 3, 4))

    class_dice = (2.0 * inter_sum + float(smooth)) / (
        pred_sum + targ_sum + float(smooth))

    if dataset == "cholecseg8k":
        present_in_val = jnp.array([0, 1, 2, 3, 4, 5, 9, 10], dtype=jnp.int32)
        class_dice = class_dice[present_in_val]
    return class_dice


def _dice_reference(logits, targets, smooth=1.0, dataset="generic"):
    N, C, H, W = targets.shape
    probs = jax.nn.softmax(logits, axis=1)
    preds = jax.nn.one_hot(jnp.argmax(probs, axis=1), C)           # (N,H,W,C)
    preds = jnp.transpose(preds, (3, 0, 1, 2)).reshape(C, -1)
    t = jnp.transpose(targets, (1, 0, 2, 3)).reshape(C, -1)
    inter = preds * t
    dice = (2.0 * inter.sum(1) + smooth) / (preds.sum(1) + t.sum(1) + smooth)
    if dataset == "cholecseg8k":
        dice = dice[jnp.array([0, 1, 2, 3, 4, 5, 9, 10])]
    return dice


if __name__ == "__main__":
    key = jax.random.PRNGKey(0)

    def _make(k, n, c, h, w):
        k1, k2 = jax.random.split(k)
        logits = jax.random.normal(k1, (n, c, h, w), dtype=jnp.float32)
        labels = jax.random.randint(k2, (n, h, w), 0, c)
        targets = jnp.transpose(
            jax.nn.one_hot(labels, c, dtype=jnp.float32), (0, 3, 1, 2))
        return logits, targets

    # (shape, dataset, max_rows override) — covers the aligned fast path, the
    # lane-padding + in-kernel-mask path, the multi-tile / 2-way megacore
    # path, and the cholecseg8k class gather.
    cases = [
        ((2, 4, 16, 16), "generic", None),
        ((1, 3, 10, 10), "generic", None),
        ((2, 4, 64, 64), "generic", 8),
        ((1, 13, 16, 16), "cholecseg8k", None),
    ]
    keys = jax.random.split(key, len(cases))
    for (shape, dataset, mr), k in zip(cases, keys):
        n, c, h, w = shape
        logits, targets = _make(k, n, c, h, w)
        out = dice_coeff(logits, targets, smooth=1.0, dataset=dataset,
                         max_rows=mr)
        out = jax.block_until_ready(out)
        ref = _dice_reference(logits, targets, smooth=1.0, dataset=dataset)
        if not jnp.allclose(out, ref, atol=1e-5, rtol=1e-5):
            raise AssertionError(
                f"mismatch for {shape} ({dataset}): pallas={out} ref={ref}")

    print("KERNEL_OK")
</pallas_src>

<mosaic_0001>
module attributes {stable_mosaic.version = 11 : i64} {
  func.func @_dice_sums_kernel(%arg0: i32, %arg1: i32, %arg2: i32, %arg3: memref<1x4x2x128xf32, #tpu.memory_space<vmem>>, %arg4: memref<1x4x2x128xf32, #tpu.memory_space<vmem>>, %arg5: memref<1x1x4x2x128xf32, #tpu.memory_space<vmem>>, %arg6: memref<1x1x4x2x128xf32, #tpu.memory_space<vmem>>, %arg7: memref<1x1x4x2x128xf32, #tpu.memory_space<vmem>>) attributes {dimension_semantics = [#tpu.dimension_semantics<parallel>, #tpu.dimension_semantics<parallel>, #tpu.dimension_semantics<arbitrary>], iteration_bounds = array<i64: 1, 2, 1>, scalar_prefetch = 0 : i64, scratch_operands = 0 : i64, tpu.core_type = #tpu.core_type<tc>, window_params = [{transform_indices = @transform_0, window_bounds = array<i64: 1, 4, 2, 128>}, {transform_indices = @transform_1, window_bounds = array<i64: 1, 4, 2, 128>}, {transform_indices = @transform_2, window_bounds = array<i64: 1, 1, 4, 2, 128>}, {transform_indices = @transform_3, window_bounds = array<i64: 1, 1, 4, 2, 128>}, {transform_indices = @transform_4, window_bounds = array<i64: 1, 1, 4, 2, 128>}]} {
    %c0_i32 = arith.constant 0 : i32
    %0 = arith.cmpi eq, %arg2, %c0_i32 : i32
    %1 = arith.extui %0 : i1 to i32
    %c0_i32_0 = arith.constant 0 : i32
    %2 = arith.cmpi ne, %1, %c0_i32_0 : i32
    scf.if %2 {
      %cst_171 = arith.constant 0.000000e+00 : f32
      %130 = vector.broadcast %cst_171 : f32 to vector<1x1x4x2x128xf32>
      %c0_172 = arith.constant 0 : index
      %c0_173 = arith.constant 0 : index
      %c0_174 = arith.constant 0 : index
      %c0_175 = arith.constant 0 : index
      %c0_176 = arith.constant 0 : index
      %131 = vector.load %arg5[%c0_172, %c0_173, %c0_174, %c0_175, %c0_176] : memref<1x1x4x2x128xf32, #tpu.memory_space<vmem>>, vector<1x1x4x2x128xf32>
      tpu.vector_store %arg5[%c0_172, %c0_173, %c0_174, %c0_175, %c0_176], %130 {strides = array<i32>} : memref<1x1x4x2x128xf32, #tpu.memory_space<vmem>>, vector<1x1x4x2x128xf32>,
      %cst_177 = arith.constant 0.000000e+00 : f32
      %132 = vector.broadcast %cst_177 : f32 to vector<1x1x4x2x128xf32>
      %c0_178 = arith.constant 0 : index
      %c0_179 = arith.constant 0 : index
      %c0_180 = arith.constant 0 : index
      %c0_181 = arith.constant 0 : index
      %c0_182 = arith.constant 0 : index
      %133 = vector.load %arg6[%c0_178, %c0_179, %c0_180, %c0_181, %c0_182] : memref<1x1x4x2x128xf32, #tpu.memory_space<vmem>>, vector<1x1x4x2x128xf32>
      tpu.vector_store %arg6[%c0_178, %c0_179, %c0_180, %c0_181, %c0_182], %132 {strides = array<i32>} : memref<1x1x4x2x128xf32, #tpu.memory_space<vmem>>, vector<1x1x4x2x128xf32>,
      %cst_183 = arith.constant 0.000000e+00 : f32
      %134 = vector.broadcast %cst_183 : f32 to vector<1x1x4x2x128xf32>
      %c0_184 = arith.constant 0 : index
      %c0_185 = arith.constant 0 : index
      %c0_186 = arith.constant 0 : index
      %c0_187 = arith.constant 0 : index
      %c0_188 = arith.constant 0 : index
      %135 = vector.load %arg7[%c0_184, %c0_185, %c0_186, %c0_187, %c0_188] : memref<1x1x4x2x128xf32, #tpu.memory_space<vmem>>, vector<1x1x4x2x128xf32>
      tpu.vector_store %arg7[%c0_184, %c0_185, %c0_186, %c0_187, %c0_188], %134 {strides = array<i32>} : memref<1x1x4x2x128xf32, #tpu.memory_space<vmem>>, vector<1x1x4x2x128xf32>,
    } else {
    }
    %c0 = arith.constant 0 : index
    %c0_1 = arith.constant 0 : index
    %c0_2 = arith.constant 0 : index
    %c0_3 = arith.constant 0 : index
    %3 = vector.load %arg3[%c0, %c0_1, %c0_2, %c0_3] : memref<1x4x2x128xf32, #tpu.memory_space<vmem>>, vector<1x1x2x128xf32>
    %4 = vector.shape_cast %3 : vector<1x1x2x128xf32> to vector<2x128xf32>
    %c0_4 = arith.constant 0 : index
    %c1 = arith.constant 1 : index
    %c0_5 = arith.constant 0 : index
    %c0_6 = arith.constant 0 : index
    %5 = vector.load %arg3[%c0_4, %c1, %c0_5, %c0_6] : memref<1x4x2x128xf32, #tpu.memory_space<vmem>>, vector<1x1x2x128xf32>
    %6 = vector.shape_cast %5 : vector<1x1x2x128xf32> to vector<2x128xf32>
    %7 = arith.maximumf %4, %6 : vector<2x128xf32>
    %c0_7 = arith.constant 0 : index
    %c2 = arith.constant 2 : index
    %c0_8 = arith.constant 0 : index
    %c0_9 = arith.constant 0 : index
    %8 = vector.load %arg3[%c0_7, %c2, %c0_8, %c0_9] : memref<1x4x2x128xf32, #tpu.memory_space<vmem>>, vector<1x1x2x128xf32>
    %9 = vector.shape_cast %8 : vector<1x1x2x128xf32> to vector<2x128xf32>
    %10 = arith.maximumf %7, %9 : vector<2x128xf32>
    %c0_10 = arith.constant 0 : index
    %c3 = arith.constant 3 : index
    %c0_11 = arith.constant 0 : index
    %c0_12 = arith.constant 0 : index
    %11 = vector.load %arg3[%c0_10, %c3, %c0_11, %c0_12] : memref<1x4x2x128xf32, #tpu.memory_space<vmem>>, vector<1x1x2x128xf32>
    %12 = vector.shape_cast %11 : vector<1x1x2x128xf32> to vector<2x128xf32>
    %13 = arith.maximumf %10, %12 : vector<2x128xf32>
    %c0_13 = arith.constant 0 : index
    %c0_14 = arith.constant 0 : index
    %c0_15 = arith.constant 0 : index
    %c0_16 = arith.constant 0 : index
    %14 = vector.load %arg3[%c0_13, %c0_14, %c0_15, %c0_16] : memref<1x4x2x128xf32, #tpu.memory_space<vmem>>, vector<1x1x2x128xf32>
    %15 = vector.shape_cast %14 : vector<1x1x2x128xf32> to vector<2x128xf32>
    %c0_17 = arith.constant 0 : index
    %c0_18 = arith.constant 0 : index
    %c0_19 = arith.constant 0 : index
    %c0_20 = arith.constant 0 : index
    %16 = vector.load %arg4[%c0_17, %c0_18, %c0_19, %c0_20] : memref<1x4x2x128xf32, #tpu.memory_space<vmem>>, vector<1x1x2x128xf32>
    %17 = vector.shape_cast %16 : vector<1x1x2x128xf32> to vector<2x128xf32>
    %18 = arith.cmpf oeq, %15, %13 : vector<2x128xf32>
    %c0_21 = arith.constant 0 : index
    %c0_22 = arith.constant 0 : index
    %c0_23 = arith.constant 0 : index
    %c0_24 = arith.constant 0 : index
    %c0_25 = arith.constant 0 : index
    %19 = vector.load %arg5[%c0_21, %c0_22, %c0_23, %c0_24, %c0_25] : memref<1x1x4x2x128xf32, #tpu.memory_space<vmem>>, vector<1x1x1x2x128xf32>
    %20 = vector.shape_cast %19 : vector<1x1x1x2x128xf32> to vector<2x128xf32>
    %cst = arith.constant 0.000000e+00 : f32
    %21 = vector.broadcast %cst : f32 to vector<2x128xf32>
    %22 = arith.select %18, %17, %21 : vector<2x128xi1>, vector<2x128xf32>
    %23 = arith.addf %20, %22 : vector<2x128xf32>
    %c0_26 = arith.constant 0 : index
    %c0_27 = arith.constant 0 : index
    %c0_28 = arith.constant 0 : index
    %c0_29 = arith.constant 0 : index
    %c0_30 = arith.constant 0 : index
    %24 = vector.load %arg5[%c0_26, %c0_27, %c0_28, %c0_29, %c0_30] : memref<1x1x4x2x128xf32, #tpu.memory_space<vmem>>, vector<1x1x1x2x128xf32>
    %25 = vector.shape_cast %24 : vector<1x1x1x2x128xf32> to vector<2x128xf32>
    %26 = vector.shape_cast %23 : vector<2x128xf32> to vector<1x1x1x2x128xf32>
    tpu.vector_store %arg5[%c0_26, %c0_27, %c0_28, %c0_29, %c0_30], %26 {strides = array<i32>} : memref<1x1x4x2x128xf32, #tpu.memory_space<vmem>>, vector<1x1x1x2x128xf32>,
    %c0_31 = arith.constant 0 : index
    %c0_32 = arith.constant 0 : index
    %c0_33 = arith.constant 0 : index
    %c0_34 = arith.constant 0 : index
    %c0_35 = arith.constant 0 : index
    %27 = vector.load %arg6[%c0_31, %c0_32, %c0_33, %c0_34, %c0_35] : memref<1x1x4x2x128xf32, #tpu.memory_space<vmem>>, vector<1x1x1x2x128xf32>
    %28 = vector.shape_cast %27 : vector<1x1x1x2x128xf32> to vector<2x128xf32>
    %29 = arith.extui %18 : vector<2x128xi1> to vector<2x128xi32>
    %30 = arith.sitofp %29 : vector<2x128xi32> to vector<2x128xf32>
    %31 = arith.addf %28, %30 : vector<2x128xf32>
    %c0_36 = arith.constant 0 : index
    %c0_37 = arith.constant 0 : index
    %c0_38 = arith.constant 0 : index
    %c0_39 = arith.constant 0 : index
    %c0_40 = arith.constant 0 : index
    %32 = vector.load %arg6[%c0_36, %c0_37, %c0_38, %c0_39, %c0_40] : memref<1x1x4x2x128xf32, #tpu.memory_space<vmem>>, vector<1x1x1x2x128xf32>
    %33 = vector.shape_cast %32 : vector<1x1x1x2x128xf32> to vector<2x128xf32>
    %34 = vector.shape_cast %31 : vector<2x128xf32> to vector<1x1x1x2x128xf32>
    tpu.vector_store %arg6[%c0_36, %c0_37, %c0_38, %c0_39, %c0_40], %34 {strides = array<i32>} : memref<1x1x4x2x128xf32, #tpu.memory_space<vmem>>, vector<1x1x1x2x128xf32>,
    %c0_41 = arith.constant 0 : index
    %c0_42 = arith.constant 0 : index
    %c0_43 = arith.constant 0 : index
    %c0_44 = arith.constant 0 : index
    %c0_45 = arith.constant 0 : index
    %35 = vector.load %arg7[%c0_41, %c0_42, %c0_43, %c0_44, %c0_45] : memref<1x1x4x2x128xf32, #tpu.memory_space<vmem>>, vector<1x1x1x2x128xf32>
    %36 = vector.shape_cast %35 : vector<1x1x1x2x128xf32> to vector<2x128xf32>
    %37 = arith.addf %36, %17 : vector<2x128xf32>
    %c0_46 = arith.constant 0 : index
    %c0_47 = arith.constant 0 : index
    %c0_48 = arith.constant 0 : index
    %c0_49 = arith.constant 0 : index
    %c0_50 = arith.constant 0 : index
    %38 = vector.load %arg7[%c0_46, %c0_47, %c0_48, %c0_49, %c0_50] : memref<1x1x4x2x128xf32, #tpu.memory_space<vmem>>, vector<1x1x1x2x128xf32>
    %39 = vector.shape_cast %38 : vector<1x1x1x2x128xf32> to vector<2x128xf32>
    %40 = vector.shape_cast %37 : vector<2x128xf32> to vector<1x1x1x2x128xf32>
    tpu.vector_store %arg7[%c0_46, %c0_47, %c0_48, %c0_49, %c0_50], %40 {strides = array<i32>} : memref<1x1x4x2x128xf32, #tpu.memory_space<vmem>>, vector<1x1x1x2x128xf32>,
    %c0_51 = arith.constant 0 : index
    %c1_52 = arith.constant 1 : index
    %c0_53 = arith.constant 0 : index
    %c0_54 = arith.constant 0 : index
    %41 = vector.load %arg3[%c0_51, %c1_52, %c0_53, %c0_54] : memref<1x4x2x128xf32, #tpu.memory_space<vmem>>, vector<1x1x2x128xf32>
    %42 = vector.shape_cast %41 : vector<1x1x2x128xf32> to vector<2x128xf32>
    %c0_55 = arith.constant 0 : index
    %c1_56 = arith.constant 1 : index
    %c0_57 = arith.constant 0 : index
    %c0_58 = arith.constant 0 : index
    %43 = vector.load %arg4[%c0_55, %c1_56, %c0_57, %c0_58] : memref<1x4x2x128xf32, #tpu.memory_space<vmem>>, vector<1x1x2x128xf32>
    %44 = vector.shape_cast %43 : vector<1x1x2x128xf32> to vector<2x128xf32>
    %45 = arith.cmpf oeq, %42, %13 : vector<2x128xf32>
    %cst_59 = arith.constant dense<true> : vector<2x128xi1>
    %46 = arith.xori %18, %cst_59 : vector<2x128xi1>
    %47 = arith.andi %45, %46 : vector<2x128xi1>
    %48 = arith.ori %18, %45 : vector<2x128xi1>
    %c0_60 = arith.constant 0 : index
    %c0_61 = arith.constant 0 : index
    %c1_62 = arith.constant 1 : index
    %c0_63 = arith.constant 0 : index
    %c0_64 = arith.constant 0 : index
    %49 = vector.load %arg5[%c0_60, %c0_61, %c1_62, %c0_63, %c0_64] : memref<1x1x4x2x128xf32, #tpu.memory_space<vmem>>, vector<1x1x1x2x128xf32>
    %50 = vector.shape_cast %49 : vector<1x1x1x2x128xf32> to vector<2x128xf32>
    %cst_65 = arith.constant 0.000000e+00 : f32
    %51 = vector.broadcast %cst_65 : f32 to vector<2x128xf32>
    %52 = arith.select %47, %44, %51 : vector<2x128xi1>, vector<2x128xf32>
    %53 = arith.addf %50, %52 : vector<2x128xf32>
    %c0_66 = arith.constant 0 : index
    %c0_67 = arith.constant 0 : index
    %c1_68 = arith.constant 1 : index
    %c0_69 = arith.constant 0 : index
    %c0_70 = arith.constant 0 : index
    %54 = vector.load %arg5[%c0_66, %c0_67, %c1_68, %c0_69, %c0_70] : memref<1x1x4x2x128xf32, #tpu.memory_space<vmem>>, vector<1x1x1x2x128xf32>
    %55 = vector.shape_cast %54 : vector<1x1x1x2x128xf32> to vector<2x128xf32>
    %56 = vector.shape_cast %53 : vector<2x128xf32> to vector<1x1x1x2x128xf32>
    tpu.vector_store %arg5[%c0_66, %c0_67, %c1_68, %c0_69, %c0_70], %56 {strides = array<i32>} : memref<1x1x4x2x128xf32, #tpu.memory_space<vmem>>, vector<1x1x1x2x128xf32>,
    %c0_71 = arith.constant 0 : index
    %c0_72 = arith.constant 0 : index
    %c1_73 = arith.constant 1 : index
    %c0_74 = arith.constant 0 : index
    %c0_75 = arith.constant 0 : index
    %57 = vector.load %arg6[%c0_71, %c0_72, %c1_73, %c0_74, %c0_75] : memref<1x1x4x2x128xf32, #tpu.memory_space<vmem>>, vector<1x1x1x2x128xf32>
    %58 = vector.shape_cast %57 : vector<1x1x1x2x128xf32> to vector<2x128xf32>
    %59 = arith.extui %47 : vector<2x128xi1> to vector<2x128xi32>
    %60 = arith.sitofp %59 : vector<2x128xi32> to vector<2x128xf32>
    %61 = arith.addf %58, %60 : vector<2x128xf32>
    %c0_76 = arith.constant 0 : index
    %c0_77 = arith.constant 0 : index
    %c1_78 = arith.constant 1 : index
    %c0_79 = arith.constant 0 : index
    %c0_80 = arith.constant 0 : index
    %62 = vector.load %arg6[%c0_76, %c0_77, %c1_78, %c0_79, %c0_80] : memref<1x1x4x2x128xf32, #tpu.memory_space<vmem>>, vector<1x1x1x2x128xf32>
    %63 = vector.shape_cast %62 : vector<1x1x1x2x128xf32> to vector<2x128xf32>
    %64 = vector.shape_cast %61 : vector<2x128xf32> to vector<1x1x1x2x128xf32>
    tpu.vector_store %arg6[%c0_76, %c0_77, %c1_78, %c0_79, %c0_80], %64 {strides = array<i32>} : memref<1x1x4x2x128xf32, #tpu.memory_space<vmem>>, vector<1x1x1x2x128xf32>,
    %c0_81 = arith.constant 0 : index
    %c0_82 = arith.constant 0 : index
    %c1_83 = arith.constant 1 : index
    %c0_84 = arith.constant 0 : index
    %c0_85 = arith.constant 0 : index
    %65 = vector.load %arg7[%c0_81, %c0_82, %c1_83, %c0_84, %c0_85] : memref<1x1x4x2x128xf32, #tpu.memory_space<vmem>>, vector<1x1x1x2x128xf32>
    %66 = vector.shape_cast %65 : vector<1x1x1x2x128xf32> to vector<2x128xf32>
    %67 = arith.addf %66, %44 : vector<2x128xf32>
    %c0_86 = arith.constant 0 : index
    %c0_87 = arith.constant 0 : index
    %c1_88 = arith.constant 1 : index
    %c0_89 = arith.constant 0 : index
    %c0_90 = arith.constant 0 : index
    %68 = vector.load %arg7[%c0_86, %c0_87, %c1_88, %c0_89, %c0_90] : memref<1x1x4x2x128xf32, #tpu.memory_space<vmem>>, vector<1x1x1x2x128xf32>
    %69 = vector.shape_cast %68 : vector<1x1x1x2x128xf32> to vector<2x128xf32>
    %70 = vector.shape_cast %67 : vector<2x128xf32> to vector<1x1x1x2x128xf32>
    tpu.vector_store %arg7[%c0_86, %c0_87, %c1_88, %c0_89, %c0_90], %70 {strides = array<i32>} : memref<1x1x4x2x128xf32, #tpu.memory_space<vmem>>, vector<1x1x1x2x128xf32>,
    %c0_91 = arith.constant 0 : index
    %c2_92 = arith.constant 2 : index
    %c0_93 = arith.constant 0 : index
    %c0_94 = arith.constant 0 : index
    %71 = vector.load %arg3[%c0_91, %c2_92, %c0_93, %c0_94] : memref<1x4x2x128xf32, #tpu.memory_space<vmem>>, vector<1x1x2x128xf32>
    %72 = vector.shape_cast %71 : vector<1x1x2x128xf32> to vector<2x128xf32>
    %c0_95 = arith.constant 0 : index
    %c2_96 = arith.constant 2 : index
    %c0_97 = arith.constant 0 : index
    %c0_98 = arith.constant 0 : index
    %73 = vector.load %arg4[%c0_95, %c2_96, %c0_97, %c0_98] : memref<1x4x2x128xf32, #tpu.memory_space<vmem>>, vector<1x1x2x128xf32>
    %74 = vector.shape_cast %73 : vector<1x1x2x128xf32> to vector<2x128xf32>
    %75 = arith.cmpf oeq, %72, %13 : vector<2x128xf32>
    %cst_99 = arith.constant dense<true> : vector<2x128xi1>
    %76 = arith.xori %48, %cst_99 : vector<2x128xi1>
    %77 = arith.andi %75, %76 : vector<2x128xi1>
    %78 = arith.ori %48, %75 : vector<2x128xi1>
    %c0_100 = arith.constant 0 : index
    %c0_101 = arith.constant 0 : index
    %c2_102 = arith.constant 2 : index
    %c0_103 = arith.constant 0 : index
    %c0_104 = arith.constant 0 : index
    %79 = vector.load %arg5[%c0_100, %c0_101, %c2_102, %c0_103, %c0_104] : memref<1x1x4x2x128xf32, #tpu.memory_space<vmem>>, vector<1x1x1x2x128xf32>
    %80 = vector.shape_cast %79 : vector<1x1x1x2x128xf32> to vector<2x128xf32>
    %cst_105 = arith.constant 0.000000e+00 : f32
    %81 = vector.broadcast %cst_105 : f32 to vector<2x128xf32>
    %82 = arith.select %77, %74, %81 : vector<2x128xi1>, vector<2x128xf32>
    %83 = arith.addf %80, %82 : vector<2x128xf32>
    %c0_106 = arith.constant 0 : index
    %c0_107 = arith.constant 0 : index
    %c2_108 = arith.constant 2 : index
    %c0_109 = arith.constant 0 : index
    %c0_110 = arith.constant 0 : index
    %84 = vector.load %arg5[%c0_106, %c0_107, %c2_108, %c0_109, %c0_110] : memref<1x1x4x2x128xf32, #tpu.memory_space<vmem>>, vector<1x1x1x2x128xf32>
    %85 = vector.shape_cast %84 : vector<1x1x1x2x128xf32> to vector<2x128xf32>
    %86 = vector.shape_cast %83 : vector<2x128xf32> to vector<1x1x1x2x128xf32>
    tpu.vector_store %arg5[%c0_106, %c0_107, %c2_108, %c0_109, %c0_110], %86 {strides = array<i32>} : memref<1x1x4x2x128xf32, #tpu.memory_space<vmem>>, vector<1x1x1x2x128xf32>,
    %c0_111 = arith.constant 0 : index
    %c0_112 = arith.constant 0 : index
    %c2_113 = arith.constant 2 : index
    %c0_114 = arith.constant 0 : index
    %c0_115 = arith.constant 0 : index
    %87 = vector.load %arg6[%c0_111, %c0_112, %c2_113, %c0_114, %c0_115] : memref<1x1x4x2x128xf32, #tpu.memory_space<vmem>>, vector<1x1x1x2x128xf32>
    %88 = vector.shape_cast %87 : vector<1x1x1x2x128xf32> to vector<2x128xf32>
    %89 = arith.extui %77 : vector<2x128xi1> to vector<2x128xi32>
    %90 = arith.sitofp %89 : vector<2x128xi32> to vector<2x128xf32>
    %91 = arith.addf %88, %90 : vector<2x128xf32>
    %c0_116 = arith.constant 0 : index
    %c0_117 = arith.constant 0 : index
    %c2_118 = arith.constant 2 : index
    %c0_119 = arith.constant 0 : index
    %c0_120 = arith.constant 0 : index
    %92 = vector.load %arg6[%c0_116, %c0_117, %c2_118, %c0_119, %c0_120] : memref<1x1x4x2x128xf32, #tpu.memory_space<vmem>>, vector<1x1x1x2x128xf32>
    %93 = vector.shape_cast %92 : vector<1x1x1x2x128xf32> to vector<2x128xf32>
    %94 = vector.shape_cast %91 : vector<2x128xf32> to vector<1x1x1x2x128xf32>
    tpu.vector_store %arg6[%c0_116, %c0_117, %c2_118, %c0_119, %c0_120], %94 {strides = array<i32>} : memref<1x1x4x2x128xf32, #tpu.memory_space<vmem>>, vector<1x1x1x2x128xf32>,
    %c0_121 = arith.constant 0 : index
    %c0_122 = arith.constant 0 : index
    %c2_123 = arith.constant 2 : index
    %c0_124 = arith.constant 0 : index
    %c0_125 = arith.constant 0 : index
    %95 = vector.load %arg7[%c0_121, %c0_122, %c2_123, %c0_124, %c0_125] : memref<1x1x4x2x128xf32, #tpu.memory_space<vmem>>, vector<1x1x1x2x128xf32>
    %96 = vector.shape_cast %95 : vector<1x1x1x2x128xf32> to vector<2x128xf32>
    %97 = arith.addf %96, %74 : vector<2x128xf32>
    %c0_126 = arith.constant 0 : index
    %c0_127 = arith.constant 0 : index
    %c2_128 = arith.constant 2 : index
    %c0_129 = arith.constant 0 : index
    %c0_130 = arith.constant 0 : index
    %98 = vector.load %arg7[%c0_126, %c0_127, %c2_128, %c0_129, %c0_130] : memref<1x1x4x2x128xf32, #tpu.memory_space<vmem>>, vector<1x1x1x2x128xf32>
    %99 = vector.shape_cast %98 : vector<1x1x1x2x128xf32> to vector<2x128xf32>
    %100 = vector.shape_cast %97 : vector<2x128xf32> to vector<1x1x1x2x128xf32>
    tpu.vector_store %arg7[%c0_126, %c0_127, %c2_128, %c0_129, %c0_130], %100 {strides = array<i32>} : memref<1x1x4x2x128xf32, #tpu.memory_space<vmem>>, vector<1x1x1x2x128xf32>,
    %c0_131 = arith.constant 0 : index
    %c3_132 = arith.constant 3 : index
    %c0_133 = arith.constant 0 : index
    %c0_134 = arith.constant 0 : index
    %101 = vector.load %arg3[%c0_131, %c3_132, %c0_133, %c0_134] : memref<1x4x2x128xf32, #tpu.memory_space<vmem>>, vector<1x1x2x128xf32>
    %102 = vector.shape_cast %101 : vector<1x1x2x128xf32> to vector<2x128xf32>
    %c0_135 = arith.constant 0 : index
    %c3_136 = arith.constant 3 : index
    %c0_137 = arith.constant 0 : index
    %c0_138 = arith.constant 0 : index
    %103 = vector.load %arg4[%c0_135, %c3_136, %c0_137, %c0_138] : memref<1x4x2x128xf32, #tpu.memory_space<vmem>>, vector<1x1x2x128xf32>
    %104 = vector.shape_cast %103 : vector<1x1x2x128xf32> to vector<2x128xf32>
    %105 = arith.cmpf oeq, %102, %13 : vector<2x128xf32>
    %cst_139 = arith.constant dense<true> : vector<2x128xi1>
    %106 = arith.xori %78, %cst_139 : vector<2x128xi1>
    %107 = arith.andi %105, %106 : vector<2x128xi1>
    %c0_140 = arith.constant 0 : index
    %c0_141 = arith.constant 0 : index
    %c3_142 = arith.constant 3 : index
    %c0_143 = arith.constant 0 : index
    %c0_144 = arith.constant 0 : index
    %108 = vector.load %arg5[%c0_140, %c0_141, %c3_142, %c0_143, %c0_144] : memref<1x1x4x2x128xf32, #tpu.memory_space<vmem>>, vector<1x1x1x2x128xf32>
    %109 = vector.shape_cast %108 : vector<1x1x1x2x128xf32> to vector<2x128xf32>
    %cst_145 = arith.constant 0.000000e+00 : f32
    %110 = vector.broadcast %cst_145 : f32 to vector<2x128xf32>
    %111 = arith.select %107, %104, %110 : vector<2x128xi1>, vector<2x128xf32>
    %112 = arith.addf %109, %111 : vector<2x128xf32>
    %c0_146 = arith.constant 0 : index
    %c0_147 = arith.constant 0 : index
    %c3_148 = arith.constant 3 : index
    %c0_149 = arith.constant 0 : index
    %c0_150 = arith.constant 0 : index
    %113 = vector.load %arg5[%c0_146, %c0_147, %c3_148, %c0_149, %c0_150] : memref<1x1x4x2x128xf32, #tpu.memory_space<vmem>>, vector<1x1x1x2x128xf32>
    %114 = vector.shape_cast %113 : vector<1x1x1x2x128xf32> to vector<2x128xf32>
    %115 = vector.shape_cast %112 : vector<2x128xf32> to vector<1x1x1x2x128xf32>
    tpu.vector_store %arg5[%c0_146, %c0_147, %c3_148, %c0_149, %c0_150], %115 {strides = array<i32>} : memref<1x1x4x2x128xf32, #tpu.memory_space<vmem>>, vector<1x1x1x2x128xf32>,
    %c0_151 = arith.constant 0 : index
    %c0_152 = arith.constant 0 : index
    %c3_153 = arith.constant 3 : index
    %c0_154 = arith.constant 0 : index
    %c0_155 = arith.constant 0 : index
    %116 = vector.load %arg6[%c0_151, %c0_152, %c3_153, %c0_154, %c0_155] : memref<1x1x4x2x128xf32, #tpu.memory_space<vmem>>, vector<1x1x1x2x128xf32>
    %117 = vector.shape_cast %116 : vector<1x1x1x2x128xf32> to vector<2x128xf32>
    %118 = arith.extui %107 : vector<2x128xi1> to vector<2x128xi32>
    %119 = arith.sitofp %118 : vector<2x128xi32> to vector<2x128xf32>
    %120 = arith.addf %117, %119 : vector<2x128xf32>
    %c0_156 = arith.constant 0 : index
    %c0_157 = arith.constant 0 : index
    %c3_158 = arith.constant 3 : index
    %c0_159 = arith.constant 0 : index
    %c0_160 = arith.constant 0 : index
    %121 = vector.load %arg6[%c0_156, %c0_157, %c3_158, %c0_159, %c0_160] : memref<1x1x4x2x128xf32, #tpu.memory_space<vmem>>, vector<1x1x1x2x128xf32>
    %122 = vector.shape_cast %121 : vector<1x1x1x2x128xf32> to vector<2x128xf32>
    %123 = vector.shape_cast %120 : vector<2x128xf32> to vector<1x1x1x2x128xf32>
    tpu.vector_store %arg6[%c0_156, %c0_157, %c3_158, %c0_159, %c0_160], %123 {strides = array<i32>} : memref<1x1x4x2x128xf32, #tpu.memory_space<vmem>>, vector<1x1x1x2x128xf32>,
    %c0_161 = arith.constant 0 : index
    %c0_162 = arith.constant 0 : index
    %c3_163 = arith.constant 3 : index
    %c0_164 = arith.constant 0 : index
    %c0_165 = arith.constant 0 : index
    %124 = vector.load %arg7[%c0_161, %c0_162, %c3_163, %c0_164, %c0_165] : memref<1x1x4x2x128xf32, #tpu.memory_space<vmem>>, vector<1x1x1x2x128xf32>
    %125 = vector.shape_cast %124 : vector<1x1x1x2x128xf32> to vector<2x128xf32>
    %126 = arith.addf %125, %104 : vector<2x128xf32>
    %c0_166 = arith.constant 0 : index
    %c0_167 = arith.constant 0 : index
    %c3_168 = arith.constant 3 : index
    %c0_169 = arith.constant 0 : index
    %c0_170 = arith.constant 0 : index
    %127 = vector.load %arg7[%c0_166, %c0_167, %c3_168, %c0_169, %c0_170] : memref<1x1x4x2x128xf32, #tpu.memory_space<vmem>>, vector<1x1x1x2x128xf32>
    %128 = vector.shape_cast %127 : vector<1x1x1x2x128xf32> to vector<2x128xf32>
    %129 = vector.shape_cast %126 : vector<2x128xf32> to vector<1x1x1x2x128xf32>
    tpu.vector_store %arg7[%c0_166, %c0_167, %c3_168, %c0_169, %c0_170], %129 {strides = array<i32>} : memref<1x1x4x2x128xf32, #tpu.memory_space<vmem>>, vector<1x1x1x2x128xf32>,
    return
  }
  func.func @transform_0(%arg0: i32, %arg1: i32, %arg2: i32) -> (i32, i32, i32, i32) {
    %c1_i32 = arith.constant 1 : i32
    %0 = arith.muli %arg0, %c1_i32 : i32
    %1 = arith.addi %0, %arg2 : i32
    %c0_i32 = arith.constant 0 : i32
    %c0_i32_0 = arith.constant 0 : i32
    %c0_i32_1 = arith.constant 0 : i32
    return %arg1, %c0_i32, %1, %c0_i32_0 : i32, i32, i32, i32
  }
  func.func @transform_1(%arg0: i32, %arg1: i32, %arg2: i32) -> (i32, i32, i32, i32) {
    %c1_i32 = arith.constant 1 : i32
    %0 = arith.muli %arg0, %c1_i32 : i32
    %1 = arith.addi %0, %arg2 : i32
    %c0_i32 = arith.constant 0 : i32
    %c0_i32_0 = arith.constant 0 : i32
    %c0_i32_1 = arith.constant 0 : i32
    return %arg1, %c0_i32, %1, %c0_i32_0 : i32, i32, i32, i32
  }
  func.func @transform_2(%arg0: i32, %arg1: i32, %arg2: i32) -> (i32, i32, i32, i32, i32) {
    %c0_i32 = arith.constant 0 : i32
    %c0_i32_0 = arith.constant 0 : i32
    %c0_i32_1 = arith.constant 0 : i32
    %c0_i32_2 = arith.constant 0 : i32
    return %arg0, %arg1, %c0_i32, %c0_i32_0, %c0_i32_1 : i32, i32, i32, i32, i32
  }
  func.func @transform_3(%arg0: i32, %arg1: i32, %arg2: i32) -> (i32, i32, i32, i32, i32) {
    %c0_i32 = arith.constant 0 : i32
    %c0_i32_0 = arith.constant 0 : i32
    %c0_i32_1 = arith.constant 0 : i32
    %c0_i32_2 = arith.constant 0 : i32
    return %arg0, %arg1, %c0_i32, %c0_i32_0, %c0_i32_1 : i32, i32, i32, i32, i32
  }
  func.func @transform_4(%arg0: i32, %arg1: i32, %arg2: i32) -> (i32, i32, i32, i32, i32) {
    %c0_i32 = arith.constant 0 : i32
    %c0_i32_0 = arith.constant 0 : i32
    %c0_i32_1 = arith.constant 0 : i32
    %c0_i32_2 = arith.constant 0 : i32
    return %arg0, %arg1, %c0_i32, %c0_i32_0, %c0_i32_1 : i32, i32, i32, i32, i32
  }
}

</mosaic_0001>

<llo_original>
// kernel: tpu_custom_call.1
$region0: #{tpu_custom_call.1}
  #allocation0 [shape = 'u32[]', space=smem, size = 0x4, offset = 0x4, fixed_abs, tag = 'smem constant byte address 0x4 - core index']
  #allocation1 [shape = 'u32[72,128]{1,0:T(1,128)}', space=vmem, size = 0x9000, scoped, tag = 'internal scratch']
  %s0 = inlined_call_operand.hbm [shape: f32[2,4,2,128], index: 0, kind: input, shape index: {}]
  %s1 = inlined_call_operand.hbm [shape: f32[2,4,2,128], index: 1, kind: input, shape index: {}]
  %s2 = inlined_call_operand.hbm [shape: f32[1,2,4,2,128], index: 2, kind: output, shape index: {0}]
  %s3 = inlined_call_operand.hbm [shape: f32[1,2,4,2,128], index: 3, kind: output, shape index: {1}]
  %s4 = inlined_call_operand.hbm [shape: f32[1,2,4,2,128], index: 4, kind: output, shape index: {2}]
  %5 = xla_tuple %s2, %s3, %s4
  %s6 = sld [smem:[#allocation0]]
  $region69: #{tpu_custom_call.1} parent=0
    _
  %s8 = ssub.s32 1, %s6
  %s9 = scalar_select 0, %s8, %s6
  $region1: #{tpu_custom_call.1} parent=0
    #allocation2 [shape = 'u8[8192]{0}', space=vmem, size = 0x2000, scoped, tag = 'input window, operand 0']
    #allocation3 [shape = 's32[2]{0}', space=sflag, size = 0x8, scoped, tag = 'scoped memory for tpu_custom_call.1']
    #allocation4 [shape = 's32[2]{0}', space=sflag, size = 0x8, scoped, tag = 'scoped memory for tpu_custom_call.1']
    #allocation5 [shape = 'u8[8192]{0}', space=vmem, size = 0x2000, scoped, tag = 'input window, operand 1']
    #allocation6 [shape = 's32[2]{0}', space=sflag, size = 0x8, scoped, tag = 'scoped memory for tpu_custom_call.1']
    #allocation7 [shape = 'u8[8192]{0}', space=vmem, size = 0x2000, scoped, tag = 'output window, operand 0']
    #allocation8 [shape = 'u8[8192]{0}', space=vmem, size = 0x2000, scoped, tag = 'output window, operand 1']
    #allocation9 [shape = 's32[2]{0}', space=sflag, size = 0x8, scoped, tag = 'scoped memory for tpu_custom_call.1']
    #allocation10 [shape = 'u8[8192]{0}', space=vmem, size = 0x2000, scoped, tag = 'output window, operand 2']
    %10 = vsyncpa [#allocation3], 0
    %s11 = scalar_lea.sflag [#allocation3], 1
    %12 = vsyncpa %s11, 0
    %13 = vsyncpa [#allocation6], 0
    %s14 = scalar_lea.sflag [#allocation6], 1
    %15 = vsyncpa %s14, 0
    %16 = vsyncpa [#allocation4], 0
    %s17 = scalar_lea.sflag [#allocation4], 1
    %18 = vsyncpa %s17, 0
    %19 = vsyncpa [#allocation9], 0
    %s20 = scalar_lea.sflag [#allocation9], 1
    %21 = vsyncpa %s20, 0
    loop: start=0, step=1, limit=4
    $region2: #{tpu_custom_call.1} parent=1 // loop_pre_header
      _
    $region3: #{tpu_custom_call.1} parent=1 // loop_header
      %s23 = sphi 0, %s27
      %p24 = scmp.ge.s32.totalorder %s23, 4
      %s30 = sphi 0, %s49
      %s31 = sphi 0, %s45
      %s32 = sphi 0, %s41
      %s33 = sphi 0, %s30
      %s34 = sphi 0, %s31
      %s35 = sphi 0, %s32
      %s36 = sphi 0, %s33
      %s37 = sphi 0, %s34
      %s38 = sphi 0, %s35
      %s56 = sphi 0, %s58
      %s59 = sphi 0, %s56
      %s60 = sphi 0, %s59
      %s76 = sphi 0, %s60
      %s86 = sphi 0, %s88
      %s89 = sphi 0, %s86
      %s90 = sphi 0, %s89
      %s106 = sphi 0, %s90
      %s114 = sphi 0, %s116
      %s117 = sphi 0, %s114
      %s118 = sphi 0, %s117
      %s134 = sphi 0, %s118
      %s142 = sphi 0, %s144
      %s145 = sphi 0, %s142
      %s146 = sphi 0, %s145
      %s162 = sphi 0, %s146
      %s170 = sphi 0, %s172
      %s173 = sphi 0, %s170
      %s174 = sphi 0, %s173
      %s190 = sphi 0, %s174
    $region4: #{tpu_custom_call.1} parent=1 // loop_header_branch
      %26 = sbr.rel (%p24) target = $region8
    $region5: #{tpu_custom_call.1} parent=1 // loop_body
      %s28 = ssub.s32 %s23, 1
      %s29 = ssub.s32 %s23, 2
      %s39 = sadd.s32 1, %s32
      %p40 = scmp.ge.s32.totalorder %s39, 1
      %s41 = scalar_select %p40, 0, %s39
      %s42 = sadd.s32 1, %s31
      %s43 = scalar_select %p40, %s42, %s31
      %p44 = scmp.ge.s32.totalorder %s43, 2
      %s45 = scalar_select %p44, 0, %s43
      %s46 = sadd.s32 1, %s30
      %s47 = scalar_select %p44, %s46, %s30
      %p48 = scmp.ge.s32.totalorder %s47, 1
      %s49 = scalar_select %p48, 0, %s47
      %s50 = sadd.s32 %s30, %s32
      %s51 = sadd.s32 %s49, %s41
      %s52 = ssub.s32 %s31, %s45
      %s53 = ssub.s32 %s50, %s51
      %s54 = sor.u32 %s52, %s53
      %p55 = scmp.eq.s32.totalorder %s54, 0
      %s57 = sadd.s32 %s56, 1
      %s58 = scalar_select %p55, %s56, %s57
      %p61 = pneg %p55
      %p62 = scmp.eq.s32.totalorder %s23, 1
      %p63 = por %p61, %p62
      %p64 = scmp.ne.s32.totalorder %s56, %s59
      %p65 = scmp.eq.s32.totalorder %s23, 0
      %p66 = por %p64, %p65
      %p67 = scmp.ne.s32.totalorder %s56, %s59
      %p68 = scmp.eq.s32.totalorder %s28, 1
      %p69 = por %p67, %p68
      %p70 = scmp.ne.s32.totalorder %s59, %s60
      %p71 = scmp.eq.s32.totalorder %s28, 0
      %p72 = por %p70, %p71
      %p73 = scmp.ne.s32.totalorder %s59, %s60
      %p74 = scmp.eq.s32.totalorder %s29, 1
      %p75 = por %p73, %p74
      %p77 = scmp.ne.s32.totalorder %s60, %s76
      %p78 = scmp.eq.s32.totalorder %s29, 0
      %p79 = por %p77, %p78
      %s80 = sadd.s32 %s30, %s32
      %s81 = sadd.s32 %s49, %s41
      %s82 = ssub.s32 %s31, %s45
      %s83 = ssub.s32 %s80, %s81
      %s84 = sor.u32 %s82, %s83
      %p85 = scmp.eq.s32.totalorder %s84, 0
      %s87 = sadd.s32 %s86, 1
      %s88 = scalar_select %p85, %s86, %s87
      %p91 = pneg %p85
      %p92 = scmp.eq.s32.totalorder %s23, 1
      %p93 = por %p91, %p92
      %p94 = scmp.ne.s32.totalorder %s86, %s89
      %p95 = scmp.eq.s32.totalorder %s23, 0
      %p96 = por %p94, %p95
      %p97 = scmp.ne.s32.totalorder %s86, %s89
      %p98 = scmp.eq.s32.totalorder %s28, 1
      %p99 = por %p97, %p98
      %p100 = scmp.ne.s32.totalorder %s89, %s90
      %p101 = scmp.eq.s32.totalorder %s28, 0
      %p102 = por %p100, %p101
      %p103 = scmp.ne.s32.totalorder %s89, %s90
      %p104 = scmp.eq.s32.totalorder %s29, 1
      %p105 = por %p103, %p104
      %p107 = scmp.ne.s32.totalorder %s90, %s106
      %p108 = scmp.eq.s32.totalorder %s29, 0
      %p109 = por %p107, %p108
      %s110 = ssub.s32 %s30, %s49
      %s111 = ssub.s32 %s31, %s45
      %s112 = sor.u32 %s110, %s111
      %p113 = scmp.eq.s32.totalorder %s112, 0
      %s115 = sadd.s32 %s114, 1
      %s116 = scalar_select %p113, %s114, %s115
      %p119 = pneg %p113
      %p120 = scmp.eq.s32.totalorder %s23, 1
      %p121 = por %p119, %p120
      %p122 = scmp.ne.s32.totalorder %s114, %s117
      %p123 = scmp.eq.s32.totalorder %s23, 0
      %p124 = por %p122, %p123
      %p125 = scmp.ne.s32.totalorder %s114, %s117
      %p126 = scmp.eq.s32.totalorder %s28, 1
      %p127 = por %p125, %p126
      %p128 = scmp.ne.s32.totalorder %s117, %s118
      %p129 = scmp.eq.s32.totalorder %s28, 0
      %p130 = por %p128, %p129
      %p131 = scmp.ne.s32.totalorder %s117, %s118
      %p132 = scmp.eq.s32.totalorder %s29, 1
      %p133 = por %p131, %p132
      %p135 = scmp.ne.s32.totalorder %s118, %s134
      %p136 = scmp.eq.s32.totalorder %s29, 0
      %p137 = por %p135, %p136
      %s138 = ssub.s32 %s30, %s49
      %s139 = ssub.s32 %s31, %s45
      %s140 = sor.u32 %s138, %s139
      %p141 = scmp.eq.s32.totalorder %s140, 0
      %s143 = sadd.s32 %s142, 1
      %s144 = scalar_select %p141, %s142, %s143
      %p147 = pneg %p141
      %p148 = scmp.eq.s32.totalorder %s23, 1
      %p149 = por %p147, %p148
      %p150 = scmp.ne.s32.totalorder %s142, %s145
      %p151 = scmp.eq.s32.totalorder %s23, 0
      %p152 = por %p150, %p151
      %p153 = scmp.ne.s32.totalorder %s142, %s145
      %p154 = scmp.eq.s32.totalorder %s28, 1
      %p155 = por %p153, %p154
      %p156 = scmp.ne.s32.totalorder %s145, %s146
      %p157 = scmp.eq.s32.totalorder %s28, 0
      %p158 = por %p156, %p157
      %p159 = scmp.ne.s32.totalorder %s145, %s146
      %p160 = scmp.eq.s32.totalorder %s29, 1
      %p161 = por %p159, %p160
      %p163 = scmp.ne.s32.totalorder %s146, %s162
      %p164 = scmp.eq.s32.totalorder %s29, 0
      %p165 = por %p163, %p164
      %s166 = ssub.s32 %s30, %s49
      %s167 = ssub.s32 %s31, %s45
      %s168 = sor.u32 %s166, %s167
      %p169 = scmp.eq.s32.totalorder %s168, 0
      %s171 = sadd.s32 %s170, 1
      %s172 = scalar_select %p169, %s170, %s171
      %p175 = pneg %p169
      %p176 = scmp.eq.s32.totalorder %s23, 1
      %p177 = por %p175, %p176
      %p178 = scmp.ne.s32.totalorder %s170, %s173
      %p179 = scmp.eq.s32.totalorder %s23, 0
      %p180 = por %p178, %p179
      %p181 = scmp.ne.s32.totalorder %s170, %s173
      %p182 = scmp.eq.s32.totalorder %s28, 1
      %p183 = por %p181, %p182
      %p184 = scmp.ne.s32.totalorder %s173, %s174
      %p185 = scmp.eq.s32.totalorder %s28, 0
      %p186 = por %p184, %p185
      %p187 = scmp.ne.s32.totalorder %s173, %s174
      %p188 = scmp.eq.s32.totalorder %s29, 1
      %p189 = por %p187, %p188
      %p191 = scmp.ne.s32.totalorder %s174, %s190
      %p192 = scmp.eq.s32.totalorder %s29, 0
      %p193 = por %p191, %p192
      %p194 = scmp.le.s32.totalorder 1, %s23
      %p195 = scmp.lt.s32.totalorder %s23, 3
      %p196 = pnand %p194, %p195
      %p197 = pneg %p196
      // Predicated region
      $region9: #{tpu_custom_call.1} parent=5 // pred_check
        _
      $region10: #{tpu_custom_call.1} parent=5 // pred_check_branch
        %199 = sbr.rel (%p196) target = $region12
      $region11: #{tpu_custom_call.1} parent=5 // pred_region
        %s200 = ssub.s32 %s23, 1
      $region12: #{tpu_custom_call.1} parent=5 // pred_fallthru
        _
      %p201 = scmp.lt.s32.totalorder %s23, 2
      // Predicated region
      $region13: #{tpu_custom_call.1} parent=5 // pred_check
        %p202 = pneg %p201
      $region14: #{tpu_custom_call.1} parent=5 // pred_check_branch
        %204 = sbr.rel (%p202) target = $region16
      $region15: #{tpu_custom_call.1} parent=5 // pred_region
        // Predicated region
        $region17: #{tpu_custom_call.1} parent=15 // pred_check
          %p205 = pneg %p66
        $region18: #{tpu_custom_call.1} parent=15 // pred_check_branch
          %207 = sbr.rel (%p205) target = $region20
        $region19: #{tpu_custom_call.1} parent=15 // pred_region
          %s208 = sand.u32 %s56, 1
          %s209 = scalar_lea.sflag [#allocation3], %s208
          %s210 = sand.u32 %s56, 1
          %s211 = smul.addr %s210, 8
          %s212 = scalar_lea.vmem [#allocation2], %s211
          %s213 = sadd.s32 %s30, %s32
          %215 = vsyncadd %s209, 0
          %s216 = smul.addr %s31, 4
          %s217 = sadd.s32 %s213, %s216
          %s218 = smul.addr %s217, 2
          %s219 = scalar_lea.hbm %s0, %s218
          %s220 = sshll.u32 %s219, 4
          %s221 = int_to_ptr.hbm [resolvable:$true] %s220
          %s222 = sshll.u32 %s212, 4
          %s223 = int_to_ptr.vmem [resolvable:$true] %s222
          %228 = dma.hbm_to_vmem [thread:$0]  %s221, 128, %s223, %s209, 32, 32, 2
        $region20: #{tpu_custom_call.1} parent=15 // pred_fallthru
          _
        // Predicated region
        $region21: #{tpu_custom_call.1} parent=15 // pred_check
          %p229 = pneg %p96
        $region22: #{tpu_custom_call.1} parent=15 // pred_check_branch
          %231 = sbr.rel (%p229) target = $region24
        $region23: #{tpu_custom_call.1} parent=15 // pred_region
          %s232 = sand.u32 %s86, 1
          %s233 = scalar_lea.sflag [#allocation6], %s232
          %s234 = sand.u32 %s86, 1
          %s235 = smul.addr %s234, 8
          %s236 = scalar_lea.vmem [#allocation5], %s235
          %s237 = sadd.s32 %s30, %s32
          %239 = vsyncadd %s233, 0
          %s240 = smul.addr %s31, 4
          %s241 = sadd.s32 %s237, %s240
          %s242 = smul.addr %s241, 2
          %s243 = scalar_lea.hbm %s1, %s242
          %s244 = sshll.u32 %s243, 4
          %s245 = int_to_ptr.hbm [resolvable:$true] %s244
          %s246 = sshll.u32 %s236, 4
          %s247 = int_to_ptr.vmem [resolvable:$true] %s246
          %252 = dma.hbm_to_vmem [thread:$0]  %s245, 128, %s247, %s233, 32, 32, 2
        $region24: #{tpu_custom_call.1} parent=15 // pred_fallthru
          _
      $region16: #{tpu_custom_call.1} parent=5 // pred_fallthru
        _
      %p253 = scmp.le.s32.totalorder 1, %s23
      %p254 = scmp.lt.s32.totalorder %s23, 3
      %p255 = pnand %p253, %p254
      %p256 = pneg %p255
      // Predicated region
      $region25: #{tpu_custom_call.1} parent=5 // pred_check
        _
      $region26: #{tpu_custom_call.1} parent=5 // pred_check_branch
        %258 = sbr.rel (%p255) target = $region28
      $region27: #{tpu_custom_call.1} parent=5 // pred_region
        %s259 = ssub.s32 %s23, 1
        %s260 = sand.u32 %s59, 1
        %s261 = scalar_lea.sflag [#allocation3], %s260
        %s262 = sand.u32 %s59, 1
        %s263 = smul.addr %s262, 8
        %s264 = scalar_lea.vmem [#allocation2], %s263
        // Predicated region
        $region29: #{tpu_custom_call.1} parent=27 // pred_check
          %p265 = pneg %p72
        $region30: #{tpu_custom_call.1} parent=27 // pred_check_branch
          %267 = sbr.rel (%p265) target = $region32
        $region31: #{tpu_custom_call.1} parent=27 // pred_region
          %269 = dma.done %s261, 128
        $region32: #{tpu_custom_call.1} parent=27 // pred_fallthru
          _
        %s270 = sand.u32 %s89, 1
        %s271 = scalar_lea.sflag [#allocation6], %s270
        %s272 = sand.u32 %s89, 1
        %s273 = smul.addr %s272, 8
        %s274 = scalar_lea.vmem [#allocation5], %s273
        // Predicated region
        $region33: #{tpu_custom_call.1} parent=27 // pred_check
          %p275 = pneg %p102
        $region34: #{tpu_custom_call.1} parent=27 // pred_check_branch
          %277 = sbr.rel (%p275) target = $region36
        $region35: #{tpu_custom_call.1} parent=27 // pred_region
          %279 = dma.done %s271, 128
        $region36: #{tpu_custom_call.1} parent=27 // pred_fallthru
          _
        %s280 = sand.u32 %s59, 1
        %s281 = scalar_lea.sflag [#allocation3], %s280
        %s282 = sand.u32 %s59, 1
        %s283 = smul.addr %s282, 8
        %s284 = scalar_lea.vmem [#allocation2], %s283
        %p285 = pneg %p72
        %p286 = pneg %p69
        %s287 = sand.u32 %s89, 1
        %s288 = scalar_lea.sflag [#allocation6], %s287
        %s289 = sand.u32 %s89, 1
        %s290 = smul.addr %s289, 8
        %s291 = scalar_lea.vmem [#allocation5], %s290
        %p292 = pneg %p102
        %p293 = pneg %p99
        %p294 = pneg %p130
        %p295 = pneg %p127
        %s296 = sand.u32 %s117, 1
        %s297 = scalar_lea.sflag [#allocation4], %s296
        %s298 = sand.u32 %s117, 1
        %s299 = smul.addr %s298, 8
        %s300 = scalar_lea.vmem [#allocation7], %s299
        %p301 = pneg %p158
        %p302 = pneg %p155
        %s303 = sand.u32 %s28, 1
        %s304 = scalar_lea.sflag [#allocation9], %s303
        %s305 = sand.u32 %s145, 1
        %s306 = smul.addr %s305, 8
        %s307 = scalar_lea.vmem [#allocation8], %s306
        %p308 = pneg %p186
        %p309 = pneg %p183
        %s310 = sand.u32 %s28, 1
        %s311 = scalar_lea.sflag [#allocation9], %s310
        %s312 = sand.u32 %s173, 1
        %s313 = smul.addr %s312, 8
        %s314 = scalar_lea.vmem [#allocation10], %s313
        %s315 = sadd.s32 %s33, %s35
        %s316 = sadd.s32 %s33, %s35
        %p317 = scmp.eq.s32.totalorder %s35, 0
        // Predicated region
        $region37: #{tpu_custom_call.1} parent=27 // pred_check
          %p318 = pneg %p317
        $region38: #{tpu_custom_call.1} parent=27 // pred_check_branch
          %320 = sbr.rel (%p318) target = $region40
        $region39: #{tpu_custom_call.1} parent=27 // pred_region
          %321 = vst [vmem:[%s300] sm:$0x3] 0.0
          %322 = vst [vmem:[%s300 + $0x2] sm:$0x3] 0.0
          %323 = vst [vmem:[%s300 + $0x4] sm:$0x3] 0.0
          %324 = vst [vmem:[%s300 + $0x6] sm:$0x3] 0.0
          %325 = vst [vmem:[%s307] sm:$0x3] 0.0
          %326 = vst [vmem:[%s307 + $0x2] sm:$0x3] 0.0
          %327 = vst [vmem:[%s307 + $0x4] sm:$0x3] 0.0
          %328 = vst [vmem:[%s307 + $0x6] sm:$0x3] 0.0
          %329 = vst [vmem:[%s314] sm:$0x3] 0.0
          %330 = vst [vmem:[%s314 + $0x2] sm:$0x3] 0.0
          %331 = vst [vmem:[%s314 + $0x4] sm:$0x3] 0.0
          %332 = vst [vmem:[%s314 + $0x6] sm:$0x3] 0.0
        $region40: #{tpu_custom_call.1} parent=27 // pred_fallthru
          _
        %v333 = vld [vmem:[%s264] sm:$0x3]
        %s334 = scalar_lea.vmem %s264, 2 [#allocation2]
        %v335 = vld [vmem:[%s334] sm:$0x3]
        %v336 = vmax.f32 %v333, %v335
        %s337 = scalar_lea.vmem %s264, 4 [#allocation2]
        %v338 = vld [vmem:[%s337] sm:$0x3]
        %v339 = vmax.f32 %v336, %v338
        %s340 = scalar_lea.vmem %s264, 6 [#allocation2]
        %v341 = vld [vmem:[%s340] sm:$0x3]
        %v342 = vmax.f32 %v339, %v341
        %v343 = vld [vmem:[%s274] sm:$0x3]
        %vm344 = vcmp.eq.f32.partialorder %v333, %v342
        %v345 = vld [vmem:[%s300] sm:$0x3]
        %v346 = vsel %vm344, %v343, 0.0
        %v347 = vadd.f32 %v345, %v346
        %348 = vst [vmem:[%s300] sm:$0x3] %v347
        %v349 = vld [vmem:[%s307] sm:$0x3]
        %v350 = vsel %vm344, 1, 0
        %v351 = vcvt.s32.f32 %v350
        %v352 = vadd.f32 %v349, %v351
        %353 = vst [vmem:[%s307] sm:$0x3] %v352
        %v354 = vld [vmem:[%s314] sm:$0x3]
        %v355 = vadd.f32 %v354, %v343
        %356 = vst [vmem:[%s314] sm:$0x3] %v355
        %v357 = vld [vmem:[%s334] sm:$0x3]
        %s358 = scalar_lea.vmem %s274, 2 [#allocation5]
        %v359 = vld [vmem:[%s358] sm:$0x3]
        %vm360 = vcmp.eq.f32.partialorder %v357, %v342
        %vm361 = vmxor %vm344, 1
        %vm362 = vmand %vm360, %vm361
        %vm363 = vmor %vm344, %vm360
        %s364 = scalar_lea.vmem %s300, 2 [#allocation7]
        %v365 = vld [vmem:[%s364] sm:$0x3]
        %v366 = vsel %vm362, %v359, 0.0
        %v367 = vadd.f32 %v365, %v366
        %368 = vst [vmem:[%s364] sm:$0x3] %v367
        %s369 = scalar_lea.vmem %s307, 2 [#allocation8]
        %v370 = vld [vmem:[%s369] sm:$0x3]
        %v371 = vsel %vm362, 1, 0
        %v372 = vcvt.s32.f32 %v371
        %v373 = vadd.f32 %v370, %v372
        %374 = vst [vmem:[%s369] sm:$0x3] %v373
        %s375 = scalar_lea.vmem %s314, 2 [#allocation10]
        %v376 = vld [vmem:[%s375] sm:$0x3]
        %v377 = vadd.f32 %v376, %v359
        %378 = vst [vmem:[%s375] sm:$0x3] %v377
        %v379 = vld [vmem:[%s337] sm:$0x3]
        %s380 = scalar_lea.vmem %s274, 4 [#allocation5]
        %v381 = vld [vmem:[%s380] sm:$0x3]
        %vm382 = vcmp.eq.f32.partialorder %v379, %v342
        %vm383 = vmxor %vm363, 1
        %vm384 = vmand %vm382, %vm383
        %vm385 = vmor %vm363, %vm382
        %s386 = scalar_lea.vmem %s300, 4 [#allocation7]
        %v387 = vld [vmem:[%s386] sm:$0x3]
        %v388 = vsel %vm384, %v381, 0.0
        %v389 = vadd.f32 %v387, %v388
        %390 = vst [vmem:[%s386] sm:$0x3] %v389
        %s391 = scalar_lea.vmem %s307, 4 [#allocation8]
        %v392 = vld [vmem:[%s391] sm:$0x3]
        %v393 = vsel %vm384, 1, 0
        %v394 = vcvt.s32.f32 %v393
        %v395 = vadd.f32 %v392, %v394
        %396 = vst [vmem:[%s391] sm:$0x3] %v395
        %s397 = scalar_lea.vmem %s314, 4 [#allocation10]
        %v398 = vld [vmem:[%s397] sm:$0x3]
        %v399 = vadd.f32 %v398, %v381
        %400 = vst [vmem:[%s397] sm:$0x3] %v399
        %v401 = vld [vmem:[%s340] sm:$0x3]
        %s402 = scalar_lea.vmem %s274, 6 [#allocation5]
        %v403 = vld [vmem:[%s402] sm:$0x3]
        %vm404 = vcmp.eq.f32.partialorder %v401, %v342
        %vm405 = vmxor %vm385, 1
        %vm406 = vmand %vm404, %vm405
        %s407 = scalar_lea.vmem %s300, 6 [#allocation7]
        %v408 = vld [vmem:[%s407] sm:$0x3]
        %v409 = vsel %vm406, %v403, 0.0
        %v410 = vadd.f32 %v408, %v409
        %411 = vst [vmem:[%s407] sm:$0x3] %v410
        %s412 = scalar_lea.vmem %s307, 6 [#allocation8]
        %v413 = vld [vmem:[%s412] sm:$0x3]
        %v414 = vsel %vm406, 1, 0
        %v415 = vcvt.s32.f32 %v414
        %v416 = vadd.f32 %v413, %v415
        %417 = vst [vmem:[%s412] sm:$0x3] %v416
        %s418 = scalar_lea.vmem %s314, 6 [#allocation10]
        %v419 = vld [vmem:[%s418] sm:$0x3]
        %v420 = vadd.f32 %v419, %v403
        %421 = vst [vmem:[%s418] sm:$0x3] %v420
        %s422 = sand.u32 %s117, 1
        %s423 = scalar_lea.sflag [#allocation4], %s422
        %s424 = sand.u32 %s117, 1
        %s425 = smul.addr %s424, 8
        %s426 = scalar_lea.vmem [#allocation7], %s425
        %s427 = sand.u32 %s28, 1
        %s428 = scalar_lea.sflag [#allocation9], %s427
        %s429 = sand.u32 %s145, 1
        %s430 = smul.addr %s429, 8
        %s431 = scalar_lea.vmem [#allocation8], %s430
        %s432 = sand.u32 %s28, 1
        %s433 = scalar_lea.sflag [#allocation9], %s432
        %s434 = sand.u32 %s173, 1
        %s435 = smul.addr %s434, 8
        %s436 = scalar_lea.vmem [#allocation10], %s435
        // Predicated region
        $region41: #{tpu_custom_call.1} parent=27 // pred_check
          %p437 = pneg %p127
        $region42: #{tpu_custom_call.1} parent=27 // pred_check_branch
          %439 = sbr.rel (%p437) target = $region44
        $region43: #{tpu_custom_call.1} parent=27 // pred_region
          %441 = vsyncadd %s423, 0
          %s442 = smul.addr %s34, 4
          %s443 = smul.addr %s33, 8
          %s444 = sadd.s32 %s442, %s443
          %s445 = smul.addr %s444, 2
          %s446 = scalar_lea.hbm %s2, %s445
          %s447 = sshll.u32 %s426, 4
          %s448 = int_to_ptr.vmem [resolvable:$true] %s447
          %s449 = sshll.u32 %s446, 4
          %s450 = int_to_ptr.hbm [resolvable:$true] %s449
          %455 = dma.vmem_to_hbm [thread:$0]  %s448, 128, %s450, %s423, 32, 32, 2
        $region44: #{tpu_custom_call.1} parent=27 // pred_fallthru
          _
        // Predicated region
        $region45: #{tpu_custom_call.1} parent=27 // pred_check
          %p456 = pneg %p155
        $region46: #{tpu_custom_call.1} parent=27 // pred_check_branch
          %458 = sbr.rel (%p456) target = $region48
        $region47: #{tpu_custom_call.1} parent=27 // pred_region
          %460 = vsyncadd %s428, 0
          %s461 = smul.addr %s34, 4
          %s462 = smul.addr %s33, 8
          %s463 = sadd.s32 %s461, %s462
          %s464 = smul.addr %s463, 2
          %s465 = scalar_lea.hbm %s3, %s464
          %s466 = sshll.u32 %s431, 4
          %s467 = int_to_ptr.vmem [resolvable:$true] %s466
          %s468 = sshll.u32 %s465, 4
          %s469 = int_to_ptr.hbm [resolvable:$true] %s468
          %474 = dma.vmem_to_hbm [thread:$0]  %s467, 128, %s469, %s428, 32, 32, 2
        $region48: #{tpu_custom_call.1} parent=27 // pred_fallthru
          _
        // Predicated region
        $region49: #{tpu_custom_call.1} parent=27 // pred_check
          %p475 = pneg %p183
        $region50: #{tpu_custom_call.1} parent=27 // pred_check_branch
          %477 = sbr.rel (%p475) target = $region52
        $region51: #{tpu_custom_call.1} parent=27 // pred_region
          %479 = vsyncadd %s433, 0
          %s480 = smul.addr %s34, 4
          %s481 = smul.addr %s33, 8
          %s482 = sadd.s32 %s480, %s481
          %s483 = smul.addr %s482, 2
          %s484 = scalar_lea.hbm %s4, %s483
          %s485 = sshll.u32 %s436, 4
          %s486 = int_to_ptr.vmem [resolvable:$true] %s485
          %s487 = sshll.u32 %s484, 4
          %s488 = int_to_ptr.hbm [resolvable:$true] %s487
          %493 = dma.vmem_to_hbm [thread:$0]  %s486, 128, %s488, %s433, 32, 32, 2
        $region52: #{tpu_custom_call.1} parent=27 // pred_fallthru
          _
      $region28: #{tpu_custom_call.1} parent=5 // pred_fallthru
        _
      %p494 = scmp.le.s32.totalorder 2, %s23
      // Predicated region
      $region53: #{tpu_custom_call.1} parent=5 // pred_check
        %p495 = pneg %p494
      $region54: #{tpu_custom_call.1} parent=5 // pred_check_branch
        %497 = sbr.rel (%p495) target = $region56
      $region55: #{tpu_custom_call.1} parent=5 // pred_region
        %s498 = ssub.s32 %s23, 2
        // Predicated region
        $region57: #{tpu_custom_call.1} parent=55 // pred_check
          %p499 = pneg %p133
        $region58: #{tpu_custom_call.1} parent=55 // pred_check_branch
          %501 = sbr.rel (%p499) target = $region60
        $region59: #{tpu_custom_call.1} parent=55 // pred_region
          %s502 = sand.u32 %s118, 1
          %s503 = scalar_lea.sflag [#allocation4], %s502
          %s504 = sand.u32 %s118, 1
          %s505 = smul.addr %s504, 8
          %s506 = scalar_lea.vmem [#allocation7], %s505
          %508 = dma.done %s503, 128
        $region60: #{tpu_custom_call.1} parent=55 // pred_fallthru
          _
        // Predicated region
        $region61: #{tpu_custom_call.1} parent=55 // pred_check
          %p509 = pneg %p161
        $region62: #{tpu_custom_call.1} parent=55 // pred_check_branch
          %511 = sbr.rel (%p509) target = $region64
        $region63: #{tpu_custom_call.1} parent=55 // pred_region
          %s512 = sand.u32 %s29, 1
          %s513 = scalar_lea.sflag [#allocation9], %s512
          %s514 = sand.u32 %s146, 1
          %s515 = smul.addr %s514, 8
          %s516 = scalar_lea.vmem [#allocation8], %s515
          %518 = dma.done %s513, 128
        $region64: #{tpu_custom_call.1} parent=55 // pred_fallthru
          _
        // Predicated region
        $region65: #{tpu_custom_call.1} parent=55 // pred_check
          %p519 = pneg %p189
        $region66: #{tpu_custom_call.1} parent=55 // pred_check_branch
          %521 = sbr.rel (%p519) target = $region68
        $region67: #{tpu_custom_call.1} parent=55 // pred_region
          %s522 = sand.u32 %s29, 1
          %s523 = scalar_lea.sflag [#allocation9], %s522
          %s524 = sand.u32 %s174, 1
          %s525 = smul.addr %s524, 8
          %s526 = scalar_lea.vmem [#allocation10], %s525
          %528 = dma.done %s523, 128
        $region68: #{tpu_custom_call.1} parent=55 // pred_fallthru
          _
      $region56: #{tpu_custom_call.1} parent=5 // pred_fallthru
        _
    $region6: #{tpu_custom_call.1} parent=1 // loop_footer
      %s27 = sadd.s32 1, %s23
    $region7: #{tpu_custom_call.1} parent=1 // loop_footer_branch
      %22 = sbr.rel target = $region3
    $region8: #{tpu_custom_call.1} parent=1 // loop_exit
      _
    %529 = vsyncpa [#allocation3], 1
    %s530 = scalar_lea.sflag [#allocation3], 1
    %531 = vsyncpa %s530, 1
    %532 = vsyncpa [#allocation6], 1
    %s533 = scalar_lea.sflag [#allocation6], 1
    %534 = vsyncpa %s533, 1
    %535 = vsyncpa [#allocation4], 1
    %s536 = scalar_lea.sflag [#allocation4], 1
    %537 = vsyncpa %s536, 1
    %538 = vsyncpa [#allocation9], 1
    %s539 = scalar_lea.sflag [#allocation9], 1
    %540 = vsyncpa %s539, 1

</llo_original>
